<compile_context>
chip_gen: v7x
topology: tpu7x:2x2x1
jax: 0.10.0
libtpu: 0.0.40
codegen_flags: <defaults>
</compile_context>

<pallas_src>
import functools

import jax
import jax.numpy as jnp
from jax import lax
from jax.experimental import pallas as pl
from jax.experimental.pallas import tpu as pltpu


# ----------------------------- helpers (glue) ------------------------------

def make_divisible(v, divisor=8, min_value=None, round_limit=0.9):
    """timm's make_divisible (used by SEModule to compute rd_channels)."""
    min_value = min_value or divisor
    new_v = max(min_value, int(v + divisor / 2) // divisor * divisor)
    if new_v < round_limit * v:
        new_v += divisor
    return new_v


def _padded_vmem_bytes(shape, dtype_bytes=4):
    """Crude VMEM footprint: last dim -> 128 lanes, 2nd-last -> 8 sublanes."""
    s = list(shape)
    if len(s) >= 1:
        s[-1] = -(-s[-1] // 128) * 128
    if len(s) >= 2:
        s[-2] = -(-s[-2] // 8) * 8
    out = dtype_bytes
    for d in s:
        out *= int(d)
    return out


def _pick_batch_block(n, max_nb=8):
    """Largest divisor of n that is <= max_nb while keeping >= 2 grid steps."""
    best = 1
    for cand in range(1, min(max_nb, n) + 1):
        if n % cand == 0 and (n // cand) >= min(2, n):
            best = cand
    return best


# ------------------------------ fused kernel --------------------------------

def _dsconv_fused_kernel(x_ref, dww_ref, b1_ref, fc1w_ref, fc1b_ref,
                         fc2w_ref, fc2b_ref, pww_ref, b2_ref,
                         o_ref, xp_scr, *,
                         ksize, h, w, h_out, w_out, c_in, c_out, pad,
                         nb, has_residual, use_blockdiag):
    """One grid step = `nb` batch images, fully fused DSConv forward.

    Lane-packed layout: activations are (rows, W*C) so channels live densely in
    the lane dimension; a kw tap shift is a static lane offset of kw*C.
    """
    wc_in = w_out * c_in
    wc_out = w_out * c_out
    hp = h + 2 * pad
    wp = w + 2 * pad

    # hoisted parameter loads (all tiny, lane-tiled in the wrapper)
    b1 = b1_ref[...]            # (1, wc_in)   folded BN1 bias, lane-tiled
    fc1w = fc1w_ref[...]        # (wc_in, rd)  SE fc1 with spatial-mean folded in
    fc1b = fc1b_ref[...]        # (1, rd)
    fc2w = fc2w_ref[...]        # (rd, wc_in)  SE fc2, lane-tiled
    fc2b = fc2b_ref[...]        # (1, wc_in)
    pww = pww_ref[...]          # block-diag (wc_in, wc_out) or plain (c_in, c_out)
    b2 = b2_ref[...]            # (1, wc_out)  folded BN2 bias, lane-tiled

    # NOTE: nb is small (<= 8); static unroll.  For larger nb switch to
    # lax.fori_loop(..., unroll=True) to bound live ranges.
    for ib in range(nb):
        x_img = x_ref[ib]       # (h, w*c_in) lane-packed image

        # ---- stage 0: padded input in VMEM scratch; zero ONLY the halo -------
        if pad > 0:
            xp_scr[0:pad, :] = jnp.zeros((pad, wp * c_in), jnp.float32)
            xp_scr[pad + h:hp, :] = jnp.zeros((pad, wp * c_in), jnp.float32)
            xp_scr[pad:pad + h, 0:pad * c_in] = jnp.zeros((h, pad * c_in),
                                                          jnp.float32)
            xp_scr[pad:pad + h, (pad + w) * c_in:wp * c_in] = jnp.zeros(
                (h, pad * c_in), jnp.float32)
            xp_scr[pad:pad + h, pad * c_in:(pad + w) * c_in] = x_img
        else:
            xp_scr[...] = x_img

        # ---- stage 1: depthwise conv (BN1 scale pre-folded) + bias + ReLU ----
        # accumulator initialized from the (0,0) tap: 8 adds, not zeros + 9.
        acc = xp_scr[0:h_out, 0:wc_in] * dww_ref[0]
        for t in range(1, ksize * ksize):
            kh, kw = divmod(t, ksize)
            acc = acc + (xp_scr[kh:kh + h_out, kw * c_in:kw * c_in + wc_in]
                         * dww_ref[t])
        y = jnp.maximum(acc + b1, 0.0)                      # (h_out, wc_in)

        # ---- stage 2: SE squeeze / excite -------------------------------------
        # spatial mean over W and the 1/(H*W) divisor are folded into fc1w_exp,
        # fc2 is lane-tiled so the gate arrives already tiled to (1, wc_in):
        # applying it to the lane-dense y slab is only ~2 vregs of VPU work.
        row_sum = jnp.sum(y, axis=0, keepdims=True)         # (1, wc_in)
        hexc = jnp.maximum(
            jnp.dot(row_sum, fc1w, preferred_element_type=jnp.float32) + fc1b,
            0.0)                                            # (1, rd)
        gate = jax.nn.sigmoid(
            jnp.dot(hexc, fc2w, preferred_element_type=jnp.float32) + fc2b)
        y = y * gate                                        # (h_out, wc_in)

        # ---- stage 3: pointwise 1x1 conv (BN2 scale pre-folded) + bias + ReLU
        #               + residual, produced directly in lane-dense layout ------
        if use_blockdiag:
            # single MXU dot, result already (h_out, w_out*C_out): one
            # contiguous full-width store, no per-row masked stores.
            z = jnp.dot(y, pww, preferred_element_type=jnp.float32)
        else:
            # TODO(synk): large-shape fallback (lane->sublane relayout of y);
            # untested at big shapes — validate before shipping such configs.
            z = jnp.dot(y.reshape(h_out * w_out, c_in), pww,
                        preferred_element_type=jnp.float32
                        ).reshape(h_out, wc_out)
        z = jnp.maximum(z + b2, 0.0)
        if has_residual:
            z = z + x_img                                   # same packed layout
        o_ref[ib] = z.astype(o_ref.dtype)


# ------------------------------ Pallas wrapper ------------------------------

def dsconv_forward_pallas(x_nchw, params, *, kernel_size, stride, padding, eps=1e-5):
    n, c_in, h, w = x_nchw.shape
    c_out = params["pw_w"].shape[0]
    rd = params["fc1_w"].shape[0]

    if stride != 1:
        # TODO(synk): stride>1 needs lane-group subsampling in the packed (W*C)
        # layout; not implemented here (demo exercises stride=1 only).
        raise NotImplementedError("DSConv Pallas kernel supports stride=1 only")

    h_out = (h + 2 * padding - kernel_size) // stride + 1
    w_out = (w + 2 * padding - kernel_size) // stride + 1
    hp, wp = h + 2 * padding, w + 2 * padding
    has_residual = (c_in == c_out) and (stride == 1)
    hw = h_out * w_out
    wc_in = w_out * c_in
    wc_out = w_out * c_out

    # NCHW -> lane-packed (N, H, W*C) f32 (channels densely in the lane dim)
    x = jnp.transpose(x_nchw, (0, 2, 3, 1)).astype(jnp.float32).reshape(
        n, h, w * c_in)

    # fold BatchNorms (eval mode) into per-channel scale/bias
    scale1 = params["gamma1"] / jnp.sqrt(params["var1"] + eps)
    bias1 = params["beta1"] - params["mean1"] * scale1
    scale2 = params["gamma2"] / jnp.sqrt(params["var2"] + eps)
    bias2 = params["beta2"] - params["mean2"] * scale2

    # --- fold BN1 scale into depthwise weights, lane-tile per w position -----
    dw_fold = params["dw_w"] * scale1[:, None, None]                   # (C,K,K)
    dw_kkc = jnp.transpose(dw_fold, (1, 2, 0)).reshape(
        kernel_size * kernel_size, c_in)                               # (K*K,C)
    dww = jnp.tile(dw_kkc, (1, w_out))                                 # (K*K, wc_in)
    b1t = jnp.tile(bias1[None, :], (1, w_out))                         # (1, wc_in)

    # --- SE weights: fold spatial-mean into fc1, lane-tile fc2 ---------------
    fc1w_exp = jnp.tile(params["fc1_w"].T, (w_out, 1)) * (1.0 / hw)    # (wc_in, rd)
    fc1b = params["fc1_b"][None, :]                                    # (1, rd)
    fc2w_exp = jnp.tile(params["fc2_w"].T, (1, w_out))                 # (rd, wc_in)
    fc2bt = jnp.tile(params["fc2_b"][None, :], (1, w_out))             # (1, wc_in)

    # --- fold BN2 scale into pointwise weights; block-diag expand ------------
    pw_fold = params["pw_w"].T * scale2[None, :]                       # (C_in, C_out)
    b2t = jnp.tile(bias2[None, :], (1, w_out))                         # (1, wc_out)
    use_blockdiag = (wc_in * wc_out * 4) <= (4 << 20)
    if use_blockdiag:
        eye = jnp.eye(w_out, dtype=jnp.float32)
        pww = (eye[:, None, :, None] * pw_fold[None, :, None, :]).reshape(
            wc_in, wc_out)                                             # (wc_in, wc_out)
    else:
        pww = pw_fold

    # batch-blocking: fatter grid steps for large N, but keep >= 2 steps
    nb_blk = _pick_batch_block(n)
    grid = (n // nb_blk,)

    kern = functools.partial(
        _dsconv_fused_kernel, ksize=kernel_size, h=h, w=w,
        h_out=h_out, w_out=w_out, c_in=c_in, c_out=c_out, pad=padding,
        nb=nb_blk, has_residual=has_residual, use_blockdiag=use_blockdiag)

    # per-grid-step VMEM footprint estimate (double-buffered in/out + scratch +
    # params) with margin; floor at 32 MiB, capped at 48 MiB for v7x's 64 MiB.
    est = (2 * nb_blk * (_padded_vmem_bytes((h, w * c_in))
                         + _padded_vmem_bytes((h_out, wc_out)))
           + _padded_vmem_bytes((hp, wp * c_in))
           + _padded_vmem_bytes((kernel_size * kernel_size, wc_in))
           + 3 * _padded_vmem_bytes((1, wc_in))
           + _padded_vmem_bytes((wc_in, rd)) + _padded_vmem_bytes((1, rd))
           + _padded_vmem_bytes((rd, wc_in))
           + _padded_vmem_bytes(pww.shape)
           + _padded_vmem_bytes((1, wc_out)))
    vmem_limit = int(min(max(4 * est, 32 * 1024 * 1024), 48 * 1024 * 1024))

    # NOTE: the SE global-average-pool forces the whole spatial extent of one
    # image into one grid step; parallelism (megacore) comes from the batch axis.
    # TODO(synk): two-pass / row-tiled SE for images too large for VMEM.
    out_packed = pl.pallas_call(
        kern,
        out_shape=jax.ShapeDtypeStruct((n, h_out, wc_out), jnp.float32),
        grid=grid,
        in_specs=[
            pl.BlockSpec((nb_blk, h, w * c_in), lambda i: (i, 0, 0)),
            pl.BlockSpec((kernel_size * kernel_size, wc_in), lambda i: (0, 0)),
            pl.BlockSpec((1, wc_in), lambda i: (0, 0)),
            pl.BlockSpec((wc_in, rd), lambda i: (0, 0)),
            pl.BlockSpec((1, rd), lambda i: (0, 0)),
            pl.BlockSpec((rd, wc_in), lambda i: (0, 0)),
            pl.BlockSpec((1, wc_in), lambda i: (0, 0)),
            pl.BlockSpec(pww.shape, lambda i: (0, 0)),
            pl.BlockSpec((1, wc_out), lambda i: (0, 0)),
        ],
        out_specs=pl.BlockSpec((nb_blk, h_out, wc_out), lambda i: (i, 0, 0)),
        scratch_shapes=[pltpu.VMEM((hp, wp * c_in), jnp.float32)],
        compiler_params=pltpu.CompilerParams(
            dimension_semantics=("parallel",),
            vmem_limit_bytes=vmem_limit),
    )(x, dww, b1t, fc1w_exp, fc1b, fc2w_exp, fc2bt, pww, b2t)

    # lane-packed (N, H_out, W_out*C_out) -> NCHW (wrapper-side layout plumbing)
    out_nhwc = out_packed.reshape(n, h_out, w_out, c_out)
    return jnp.transpose(out_nhwc, (0, 3, 1, 2))


# ---------------------------- pure-JAX reference ----------------------------

def dsconv_forward_ref(x_nchw, params, *, kernel_size, stride, padding, eps=1e-5):
    n, c_in, h, w = x_nchw.shape
    c_out = params["pw_w"].shape[0]
    has_residual = (c_in == c_out) and (stride == 1)

    dw_w = params["dw_w"][:, None, :, :]                               # (C_in,1,kh,kw)
    y = lax.conv_general_dilated(
        x_nchw, dw_w, (stride, stride), [(padding, padding), (padding, padding)],
        dimension_numbers=("NCHW", "OIHW", "NCHW"), feature_group_count=c_in)
    y = (y - params["mean1"][None, :, None, None]) / jnp.sqrt(params["var1"] + eps)[None, :, None, None]
    y = y * params["gamma1"][None, :, None, None] + params["beta1"][None, :, None, None]
    y = jnp.maximum(y, 0.0)

    pooled = y.mean(axis=(2, 3))                                       # (N, C_in)
    hse = jnp.maximum(pooled @ params["fc1_w"].T + params["fc1_b"], 0.0)
    gate = jax.nn.sigmoid(hse @ params["fc2_w"].T + params["fc2_b"])   # (N, C_in)
    y = y * gate[:, :, None, None]

    z = jnp.einsum("nchw,oc->nohw", y, params["pw_w"])
    z = (z - params["mean2"][None, :, None, None]) / jnp.sqrt(params["var2"] + eps)[None, :, None, None]
    z = z * params["gamma2"][None, :, None, None] + params["beta2"][None, :, None, None]
    z = jnp.maximum(z, 0.0)
    if has_residual:
        z = z + x_nchw
    return z


# ----------------------------------- main -----------------------------------

def _make_params(key, c_in, c_out, k, rd):
    ks = jax.random.split(key, 16)
    return {
        "dw_w":  0.1 * jax.random.normal(ks[0], (c_in, k, k), jnp.float32),
        "gamma1": 1.0 + 0.1 * jax.random.normal(ks[1], (c_in,), jnp.float32),
        "beta1": 0.1 * jax.random.normal(ks[2], (c_in,), jnp.float32),
        "mean1": 0.05 * jax.random.normal(ks[3], (c_in,), jnp.float32),
        "var1":  1.0 + 0.1 * jnp.abs(jax.random.normal(ks[4], (c_in,), jnp.float32)),
        "fc1_w": 0.3 * jax.random.normal(ks[5], (rd, c_in), jnp.float32),
        "fc1_b": 0.1 * jax.random.normal(ks[6], (rd,), jnp.float32),
        "fc2_w": 0.3 * jax.random.normal(ks[7], (c_in, rd), jnp.float32),
        "fc2_b": 0.1 * jax.random.normal(ks[8], (c_in,), jnp.float32),
        "pw_w":  0.2 * jax.random.normal(ks[9], (c_out, c_in), jnp.float32),
        "gamma2": 1.0 + 0.1 * jax.random.normal(ks[10], (c_out,), jnp.float32),
        "beta2": 0.1 * jax.random.normal(ks[11], (c_out,), jnp.float32),
        "mean2": 0.05 * jax.random.normal(ks[12], (c_out,), jnp.float32),
        "var2":  1.0 + 0.1 * jnp.abs(jax.random.normal(ks[13], (c_out,), jnp.float32)),
    }


if __name__ == "__main__":
    # DSConv config (EfficientNet / MobileNetV3 first-block style), small shapes.
    N, H, W = 2, 16, 16
    K, STRIDE, PAD = 3, 1, 1
    C_IN = 4
    RD = make_divisible(C_IN * (1 / 16.0), 4, round_limit=0.0)         # SE reduced channels

    key = jax.random.PRNGKey(0)
    k_p1, k_p2, k_x = jax.random.split(key, 3)
    x = jax.random.normal(k_x, (N, C_IN, H, W), jnp.float32)

    # case 1: residual path (c_out == c_in, stride == 1)
    C_OUT1 = 4
    params1 = _make_params(k_p1, C_IN, C_OUT1, K, RD)
    out1 = jax.block_until_ready(
        dsconv_forward_pallas(x, params1, kernel_size=K, stride=STRIDE, padding=PAD))
    ref1 = jax.block_until_ready(
        dsconv_forward_ref(x, params1, kernel_size=K, stride=STRIDE, padding=PAD))
    assert out1.shape == (N, C_OUT1, H, W), out1.shape
    assert jnp.allclose(out1, ref1, rtol=1e-4, atol=1e-4), float(jnp.abs(out1 - ref1).max())

    # case 2: no-residual path (c_out != c_in) -- verifies the trace-time branch
    # that omits the residual add (no zero residual tensor is ever built/DMA'd).
    C_OUT2 = 8
    params2 = _make_params(k_p2, C_IN, C_OUT2, K, RD)
    out2 = jax.block_until_ready(
        dsconv_forward_pallas(x, params2, kernel_size=K, stride=STRIDE, padding=PAD))
    ref2 = jax.block_until_ready(
        dsconv_forward_ref(x, params2, kernel_size=K, stride=STRIDE, padding=PAD))
    assert out2.shape == (N, C_OUT2, H, W), out2.shape
    assert jnp.allclose(out2, ref2, rtol=1e-4, atol=1e-4), float(jnp.abs(out2 - ref2).max())

    print("KERNEL_OK")
</pallas_src>

<mosaic_0001>
module attributes {stable_mosaic.version = 11 : i64} {
  func.func @_dsconv_fused_kernel(%arg0: i32, %arg1: memref<1x16x64xf32, #tpu.memory_space<vmem>>, %arg2: memref<9x64xf32, #tpu.memory_space<vmem>>, %arg3: memref<1x64xf32, #tpu.memory_space<vmem>>, %arg4: memref<64x4xf32, #tpu.memory_space<vmem>>, %arg5: memref<1x4xf32, #tpu.memory_space<vmem>>, %arg6: memref<4x64xf32, #tpu.memory_space<vmem>>, %arg7: memref<1x64xf32, #tpu.memory_space<vmem>>, %arg8: memref<64x64xf32, #tpu.memory_space<vmem>>, %arg9: memref<1x64xf32, #tpu.memory_space<vmem>>, %arg10: memref<1x16x64xf32, #tpu.memory_space<vmem>>, %arg11: memref<18x72xf32, #tpu.memory_space<vmem>>) attributes {dimension_semantics = [#tpu.dimension_semantics<parallel>], iteration_bounds = array<i64: 2>, scalar_prefetch = 0 : i64, scratch_operands = 1 : i64, tpu.core_type = #tpu.core_type<tc>, window_params = [{transform_indices = @transform_0, window_bounds = array<i64: 1, 16, 64>}, {pipeline_mode = #tpu.pipeline_mode<synchronous>, transform_indices = @transform_1, window_bounds = array<i64: 9, 64>}, {pipeline_mode = #tpu.pipeline_mode<synchronous>, transform_indices = @transform_2, window_bounds = array<i64: 1, 64>}, {pipeline_mode = #tpu.pipeline_mode<synchronous>, transform_indices = @transform_3, window_bounds = array<i64: 64, 4>}, {pipeline_mode = #tpu.pipeline_mode<synchronous>, transform_indices = @transform_4, window_bounds = array<i64: 1, 4>}, {pipeline_mode = #tpu.pipeline_mode<synchronous>, transform_indices = @transform_5, window_bounds = array<i64: 4, 64>}, {pipeline_mode = #tpu.pipeline_mode<synchronous>, transform_indices = @transform_6, window_bounds = array<i64: 1, 64>}, {pipeline_mode = #tpu.pipeline_mode<synchronous>, transform_indices = @transform_7, window_bounds = array<i64: 64, 64>}, {pipeline_mode = #tpu.pipeline_mode<synchronous>, transform_indices = @transform_8, window_bounds = array<i64: 1, 64>}, {transform_indices = @transform_9, window_bounds = array<i64: 1, 16, 64>}]} {
    %c0 = arith.constant 0 : index
    %c0_0 = arith.constant 0 : index
    %0 = vector.load %arg3[%c0, %c0_0] : memref<1x64xf32, #tpu.memory_space<vmem>>, vector<1x64xf32>
    %c0_1 = arith.constant 0 : index
    %c0_2 = arith.constant 0 : index
    %1 = vector.load %arg4[%c0_1, %c0_2] : memref<64x4xf32, #tpu.memory_space<vmem>>, vector<64x4xf32>
    %c0_3 = arith.constant 0 : index
    %c0_4 = arith.constant 0 : index
    %2 = vector.load %arg5[%c0_3, %c0_4] : memref<1x4xf32, #tpu.memory_space<vmem>>, vector<1x4xf32>
    %c0_5 = arith.constant 0 : index
    %c0_6 = arith.constant 0 : index
    %3 = vector.load %arg6[%c0_5, %c0_6] : memref<4x64xf32, #tpu.memory_space<vmem>>, vector<4x64xf32>
    %c0_7 = arith.constant 0 : index
    %c0_8 = arith.constant 0 : index
    %4 = vector.load %arg7[%c0_7, %c0_8] : memref<1x64xf32, #tpu.memory_space<vmem>>, vector<1x64xf32>
    %c0_9 = arith.constant 0 : index
    %c0_10 = arith.constant 0 : index
    %5 = vector.load %arg8[%c0_9, %c0_10] : memref<64x64xf32, #tpu.memory_space<vmem>>, vector<64x64xf32>
    %c0_11 = arith.constant 0 : index
    %c0_12 = arith.constant 0 : index
    %6 = vector.load %arg9[%c0_11, %c0_12] : memref<1x64xf32, #tpu.memory_space<vmem>>, vector<1x64xf32>
    %c0_13 = arith.constant 0 : index
    %c0_14 = arith.constant 0 : index
    %c0_15 = arith.constant 0 : index
    %7 = vector.load %arg1[%c0_13, %c0_14, %c0_15] : memref<1x16x64xf32, #tpu.memory_space<vmem>>, vector<1x16x64xf32>
    %8 = vector.shape_cast %7 : vector<1x16x64xf32> to vector<16x64xf32>
    %cst = arith.constant 0.000000e+00 : f32
    %9 = vector.broadcast %cst : f32 to vector<1x72xf32>
    %c0_16 = arith.constant 0 : index
    %c0_17 = arith.constant 0 : index
    %10 = vector.load %arg11[%c0_16, %c0_17] : memref<18x72xf32, #tpu.memory_space<vmem>>, vector<1x72xf32>
    tpu.vector_store %arg11[%c0_16, %c0_17], %9 {strides = array<i32>} : memref<18x72xf32, #tpu.memory_space<vmem>>, vector<1x72xf32>,
    %cst_18 = arith.constant 0.000000e+00 : f32
    %11 = vector.broadcast %cst_18 : f32 to vector<1x72xf32>
    %c17 = arith.constant 17 : index
    %c0_19 = arith.constant 0 : index
    %12 = vector.load %arg11[%c17, %c0_19] : memref<18x72xf32, #tpu.memory_space<vmem>>, vector<1x72xf32>
    tpu.vector_store %arg11[%c17, %c0_19], %11 {strides = array<i32>} : memref<18x72xf32, #tpu.memory_space<vmem>>, vector<1x72xf32>,
    %cst_20 = arith.constant 0.000000e+00 : f32
    %13 = vector.broadcast %cst_20 : f32 to vector<16x4xf32>
    %c1 = arith.constant 1 : index
    %c0_21 = arith.constant 0 : index
    %14 = vector.load %arg11[%c1, %c0_21] : memref<18x72xf32, #tpu.memory_space<vmem>>, vector<16x4xf32>
    tpu.vector_store %arg11[%c1, %c0_21], %13 {strides = array<i32>} : memref<18x72xf32, #tpu.memory_space<vmem>>, vector<16x4xf32>,
    %cst_22 = arith.constant 0.000000e+00 : f32
    %15 = vector.broadcast %cst_22 : f32 to vector<16x4xf32>
    %c1_23 = arith.constant 1 : index
    %c68 = arith.constant 68 : index
    %16 = vector.load %arg11[%c1_23, %c68] : memref<18x72xf32, #tpu.memory_space<vmem>>, vector<16x4xf32>
    tpu.vector_store %arg11[%c1_23, %c68], %15 {strides = array<i32>} : memref<18x72xf32, #tpu.memory_space<vmem>>, vector<16x4xf32>,
    %c1_24 = arith.constant 1 : index
    %c4 = arith.constant 4 : index
    %17 = vector.load %arg11[%c1_24, %c4] : memref<18x72xf32, #tpu.memory_space<vmem>>, vector<16x64xf32>
    tpu.vector_store %arg11[%c1_24, %c4], %8 {strides = array<i32>} : memref<18x72xf32, #tpu.memory_space<vmem>>, vector<16x64xf32>,
    %c0_25 = arith.constant 0 : index
    %c0_26 = arith.constant 0 : index
    %18 = vector.load %arg11[%c0_25, %c0_26] : memref<18x72xf32, #tpu.memory_space<vmem>>, vector<16x64xf32>
    %c0_27 = arith.constant 0 : index
    %c0_28 = arith.constant 0 : index
    %19 = vector.load %arg2[%c0_27, %c0_28] : memref<9x64xf32, #tpu.memory_space<vmem>>, vector<1x64xf32>
    %20 = vector.shape_cast %19 : vector<1x64xf32> to vector<64xf32>
    %21 = vector.shape_cast %20 : vector<64xf32> to vector<1x64xf32>
    %22 = vector.broadcast %21 : vector<1x64xf32> to vector<16x64xf32>
    %23 = arith.mulf %18, %22 : vector<16x64xf32>
    %c0_29 = arith.constant 0 : index
    %c4_30 = arith.constant 4 : index
    %24 = vector.load %arg11[%c0_29, %c4_30] : memref<18x72xf32, #tpu.memory_space<vmem>>, vector<16x64xf32>
    %c1_31 = arith.constant 1 : index
    %c0_32 = arith.constant 0 : index
    %25 = vector.load %arg2[%c1_31, %c0_32] : memref<9x64xf32, #tpu.memory_space<vmem>>, vector<1x64xf32>
    %26 = vector.shape_cast %25 : vector<1x64xf32> to vector<64xf32>
    %27 = vector.shape_cast %26 : vector<64xf32> to vector<1x64xf32>
    %28 = vector.broadcast %27 : vector<1x64xf32> to vector<16x64xf32>
    %29 = arith.mulf %24, %28 : vector<16x64xf32>
    %30 = arith.addf %23, %29 : vector<16x64xf32>
    %c0_33 = arith.constant 0 : index
    %c8 = arith.constant 8 : index
    %31 = vector.load %arg11[%c0_33, %c8] : memref<18x72xf32, #tpu.memory_space<vmem>>, vector<16x64xf32>
    %c2 = arith.constant 2 : index
    %c0_34 = arith.constant 0 : index
    %32 = vector.load %arg2[%c2, %c0_34] : memref<9x64xf32, #tpu.memory_space<vmem>>, vector<1x64xf32>
    %33 = vector.shape_cast %32 : vector<1x64xf32> to vector<64xf32>
    %34 = vector.shape_cast %33 : vector<64xf32> to vector<1x64xf32>
    %35 = vector.broadcast %34 : vector<1x64xf32> to vector<16x64xf32>
    %36 = arith.mulf %31, %35 : vector<16x64xf32>
    %37 = arith.addf %30, %36 : vector<16x64xf32>
    %c1_35 = arith.constant 1 : index
    %c0_36 = arith.constant 0 : index
    %38 = vector.load %arg11[%c1_35, %c0_36] : memref<18x72xf32, #tpu.memory_space<vmem>>, vector<16x64xf32>
    %c3 = arith.constant 3 : index
    %c0_37 = arith.constant 0 : index
    %39 = vector.load %arg2[%c3, %c0_37] : memref<9x64xf32, #tpu.memory_space<vmem>>, vector<1x64xf32>
    %40 = vector.shape_cast %39 : vector<1x64xf32> to vector<64xf32>
    %41 = vector.shape_cast %40 : vector<64xf32> to vector<1x64xf32>
    %42 = vector.broadcast %41 : vector<1x64xf32> to vector<16x64xf32>
    %43 = arith.mulf %38, %42 : vector<16x64xf32>
    %44 = arith.addf %37, %43 : vector<16x64xf32>
    %c1_38 = arith.constant 1 : index
    %c4_39 = arith.constant 4 : index
    %45 = vector.load %arg11[%c1_38, %c4_39] : memref<18x72xf32, #tpu.memory_space<vmem>>, vector<16x64xf32>
    %c4_40 = arith.constant 4 : index
    %c0_41 = arith.constant 0 : index
    %46 = vector.load %arg2[%c4_40, %c0_41] : memref<9x64xf32, #tpu.memory_space<vmem>>, vector<1x64xf32>
    %47 = vector.shape_cast %46 : vector<1x64xf32> to vector<64xf32>
    %48 = vector.shape_cast %47 : vector<64xf32> to vector<1x64xf32>
    %49 = vector.broadcast %48 : vector<1x64xf32> to vector<16x64xf32>
    %50 = arith.mulf %45, %49 : vector<16x64xf32>
    %51 = arith.addf %44, %50 : vector<16x64xf32>
    %c1_42 = arith.constant 1 : index
    %c8_43 = arith.constant 8 : index
    %52 = vector.load %arg11[%c1_42, %c8_43] : memref<18x72xf32, #tpu.memory_space<vmem>>, vector<16x64xf32>
    %c5 = arith.constant 5 : index
    %c0_44 = arith.constant 0 : index
    %53 = vector.load %arg2[%c5, %c0_44] : memref<9x64xf32, #tpu.memory_space<vmem>>, vector<1x64xf32>
    %54 = vector.shape_cast %53 : vector<1x64xf32> to vector<64xf32>
    %55 = vector.shape_cast %54 : vector<64xf32> to vector<1x64xf32>
    %56 = vector.broadcast %55 : vector<1x64xf32> to vector<16x64xf32>
    %57 = arith.mulf %52, %56 : vector<16x64xf32>
    %58 = arith.addf %51, %57 : vector<16x64xf32>
    %c2_45 = arith.constant 2 : index
    %c0_46 = arith.constant 0 : index
    %59 = vector.load %arg11[%c2_45, %c0_46] : memref<18x72xf32, #tpu.memory_space<vmem>>, vector<16x64xf32>
    %c6 = arith.constant 6 : index
    %c0_47 = arith.constant 0 : index
    %60 = vector.load %arg2[%c6, %c0_47] : memref<9x64xf32, #tpu.memory_space<vmem>>, vector<1x64xf32>
    %61 = vector.shape_cast %60 : vector<1x64xf32> to vector<64xf32>
    %62 = vector.shape_cast %61 : vector<64xf32> to vector<1x64xf32>
    %63 = vector.broadcast %62 : vector<1x64xf32> to vector<16x64xf32>
    %64 = arith.mulf %59, %63 : vector<16x64xf32>
    %65 = arith.addf %58, %64 : vector<16x64xf32>
    %c2_48 = arith.constant 2 : index
    %c4_49 = arith.constant 4 : index
    %66 = vector.load %arg11[%c2_48, %c4_49] : memref<18x72xf32, #tpu.memory_space<vmem>>, vector<16x64xf32>
    %c7 = arith.constant 7 : index
    %c0_50 = arith.constant 0 : index
    %67 = vector.load %arg2[%c7, %c0_50] : memref<9x64xf32, #tpu.memory_space<vmem>>, vector<1x64xf32>
    %68 = vector.shape_cast %67 : vector<1x64xf32> to vector<64xf32>
    %69 = vector.shape_cast %68 : vector<64xf32> to vector<1x64xf32>
    %70 = vector.broadcast %69 : vector<1x64xf32> to vector<16x64xf32>
    %71 = arith.mulf %66, %70 : vector<16x64xf32>
    %72 = arith.addf %65, %71 : vector<16x64xf32>
    %c2_51 = arith.constant 2 : index
    %c8_52 = arith.constant 8 : index
    %73 = vector.load %arg11[%c2_51, %c8_52] : memref<18x72xf32, #tpu.memory_space<vmem>>, vector<16x64xf32>
    %c8_53 = arith.constant 8 : index
    %c0_54 = arith.constant 0 : index
    %74 = vector.load %arg2[%c8_53, %c0_54] : memref<9x64xf32, #tpu.memory_space<vmem>>, vector<1x64xf32>
    %75 = vector.shape_cast %74 : vector<1x64xf32> to vector<64xf32>
    %76 = vector.shape_cast %75 : vector<64xf32> to vector<1x64xf32>
    %77 = vector.broadcast %76 : vector<1x64xf32> to vector<16x64xf32>
    %78 = arith.mulf %73, %77 : vector<16x64xf32>
    %79 = arith.addf %72, %78 : vector<16x64xf32>
    %80 = vector.broadcast %0 : vector<1x64xf32> to vector<16x64xf32>
    %81 = arith.addf %79, %80 : vector<16x64xf32>
    %cst_55 = arith.constant 0.000000e+00 : f32
    %82 = vector.broadcast %cst_55 : f32 to vector<16x64xf32>
    %83 = arith.maximumf %81, %82 : vector<16x64xf32>
    %cst_56 = arith.constant dense<0.000000e+00> : vector<64xf32>
    %84 = vector.multi_reduction <add>, %83, %cst_56 [0] : vector<16x64xf32> to vector<64xf32>
    %85 = vector.shape_cast %84 : vector<64xf32> to vector<1x64xf32>
    %cst_57 = arith.constant dense<0.000000e+00> : vector<1x4xf32>
    %86 = tpu.matmul %85, %1, %cst_57 {dimension_numbers = #tpu.dot_dimension_numbers<[1], [0], [0], [1], [0, 0, 1, 1], [], []>} : vector<1x64xf32>, vector<64x4xf32>, vector<1x4xf32> -> vector<1x4xf32>
    %87 = arith.addf %86, %2 : vector<1x4xf32>
    %cst_58 = arith.constant 0.000000e+00 : f32
    %88 = vector.broadcast %cst_58 : f32 to vector<1x4xf32>
    %89 = arith.maximumf %87, %88 : vector<1x4xf32>
    %cst_59 = arith.constant dense<0.000000e+00> : vector<1x64xf32>
    %90 = tpu.matmul %89, %3, %cst_59 {dimension_numbers = #tpu.dot_dimension_numbers<[1], [0], [0], [1], [0, 0, 1, 1], [], []>} : vector<1x4xf32>, vector<4x64xf32>, vector<1x64xf32> -> vector<1x64xf32>
    %91 = arith.addf %90, %4 : vector<1x64xf32>
    %92 = arith.negf %91 : vector<1x64xf32>
    %93 = math.exp %92 : vector<1x64xf32>
    %cst_60 = arith.constant 1.000000e+00 : f32
    %94 = vector.broadcast %cst_60 : f32 to vector<1x64xf32>
    %95 = arith.addf %94, %93 : vector<1x64xf32>
    %96 = arith.divf %94, %95 : vector<1x64xf32>
    %97 = vector.broadcast %96 : vector<1x64xf32> to vector<16x64xf32>
    %98 = arith.mulf %83, %97 : vector<16x64xf32>
    %cst_61 = arith.constant dense<0.000000e+00> : vector<16x64xf32>
    %99 = tpu.matmul %98, %5, %cst_61 {dimension_numbers = #tpu.dot_dimension_numbers<[1], [0], [0], [1], [0, 0, 1, 1], [], []>} : vector<16x64xf32>, vector<64x64xf32>, vector<16x64xf32> -> vector<16x64xf32>
    %100 = vector.broadcast %6 : vector<1x64xf32> to vector<16x64xf32>
    %101 = arith.addf %99, %100 : vector<16x64xf32>
    %cst_62 = arith.constant 0.000000e+00 : f32
    %102 = vector.broadcast %cst_62 : f32 to vector<16x64xf32>
    %103 = arith.maximumf %101, %102 : vector<16x64xf32>
    %104 = arith.addf %103, %8 : vector<16x64xf32>
    %c0_63 = arith.constant 0 : index
    %c0_64 = arith.constant 0 : index
    %c0_65 = arith.constant 0 : index
    %105 = vector.load %arg10[%c0_63, %c0_64, %c0_65] : memref<1x16x64xf32, #tpu.memory_space<vmem>>, vector<1x16x64xf32>
    %106 = vector.shape_cast %105 : vector<1x16x64xf32> to vector<16x64xf32>
    %107 = vector.shape_cast %104 : vector<16x64xf32> to vector<1x16x64xf32>
    tpu.vector_store %arg10[%c0_63, %c0_64, %c0_65], %107 {strides = array<i32>} : memref<1x16x64xf32, #tpu.memory_space<vmem>>, vector<1x16x64xf32>,
    return
  }
  func.func @transform_0(%arg0: i32) -> (i32, i32, i32) {
    %c0_i32 = arith.constant 0 : i32
    %c0_i32_0 = arith.constant 0 : i32
    %c0_i32_1 = arith.constant 0 : i32
    return %arg0, %c0_i32, %c0_i32_0 : i32, i32, i32
  }
  func.func @transform_1(%arg0: i32) -> (i32, i32) {
    %c0_i32 = arith.constant 0 : i32
    %c0_i32_0 = arith.constant 0 : i32
    %c0_i32_1 = arith.constant 0 : i32
    return %c0_i32, %c0_i32_0 : i32, i32
  }
  func.func @transform_2(%arg0: i32) -> (i32, i32) {
    %c0_i32 = arith.constant 0 : i32
    %c0_i32_0 = arith.constant 0 : i32
    %c0_i32_1 = arith.constant 0 : i32
    return %c0_i32, %c0_i32_0 : i32, i32
  }
  func.func @transform_3(%arg0: i32) -> (i32, i32) {
    %c0_i32 = arith.constant 0 : i32
    %c0_i32_0 = arith.constant 0 : i32
    %c0_i32_1 = arith.constant 0 : i32
    return %c0_i32, %c0_i32_0 : i32, i32
  }
  func.func @transform_4(%arg0: i32) -> (i32, i32) {
    %c0_i32 = arith.constant 0 : i32
    %c0_i32_0 = arith.constant 0 : i32
    %c0_i32_1 = arith.constant 0 : i32
    return %c0_i32, %c0_i32_0 : i32, i32
  }
  func.func @transform_5(%arg0: i32) -> (i32, i32) {
    %c0_i32 = arith.constant 0 : i32
    %c0_i32_0 = arith.constant 0 : i32
    %c0_i32_1 = arith.constant 0 : i32
    return %c0_i32, %c0_i32_0 : i32, i32
  }
  func.func @transform_6(%arg0: i32) -> (i32, i32) {
    %c0_i32 = arith.constant 0 : i32
    %c0_i32_0 = arith.constant 0 : i32
    %c0_i32_1 = arith.constant 0 : i32
    return %c0_i32, %c0_i32_0 : i32, i32
  }
  func.func @transform_7(%arg0: i32) -> (i32, i32) {
    %c0_i32 = arith.constant 0 : i32
    %c0_i32_0 = arith.constant 0 : i32
    %c0_i32_1 = arith.constant 0 : i32
    return %c0_i32, %c0_i32_0 : i32, i32
  }
  func.func @transform_8(%arg0: i32) -> (i32, i32) {
    %c0_i32 = arith.constant 0 : i32
    %c0_i32_0 = arith.constant 0 : i32
    %c0_i32_1 = arith.constant 0 : i32
    return %c0_i32, %c0_i32_0 : i32, i32
  }
  func.func @transform_9(%arg0: i32) -> (i32, i32, i32) {
    %c0_i32 = arith.constant 0 : i32
    %c0_i32_0 = arith.constant 0 : i32
    %c0_i32_1 = arith.constant 0 : i32
    return %arg0, %c0_i32, %c0_i32_0 : i32, i32, i32
  }
}

</mosaic_0001>

<llo_original>
// kernel: tpu_custom_call.1
$region0: #{tpu_custom_call.1}
  #allocation0 [shape = 'u32[]', space=smem, size = 0x4, offset = 0x4, fixed_abs, tag = 'smem constant byte address 0x4 - core index']
  #allocation1 [shape = 'u32[144,128]{1,0:T(1,128)}', space=vmem, size = 0x12000, scoped, tag = 'internal scratch']
  #allocation2 [shape = 'f32[18,72]{1,0:T(8,128)}', space=vmem, size = 0x3000, scoped, tag = 'scratch operand']
  %s0 = inlined_call_operand.hbm [shape: f32[2,16,64], index: 0, kind: input, shape index: {}]
  %s1 = inlined_call_operand.vmem [shape: f32[9,64], index: 1, kind: input, shape index: {}]
  %s2 = inlined_call_operand.vmem [shape: f32[1,64], index: 2, kind: input, shape index: {}]
  %s3 = inlined_call_operand.vmem [shape: f32[64,4], index: 3, kind: input, shape index: {}]
  %s4 = inlined_call_operand.vmem [shape: f32[1,4], index: 4, kind: input, shape index: {}]
  %s5 = inlined_call_operand.vmem [shape: f32[4,64], index: 5, kind: input, shape index: {}]
  %s6 = inlined_call_operand.vmem [shape: f32[1,64], index: 6, kind: input, shape index: {}]
  %s7 = inlined_call_operand.vmem [shape: f32[64,64], index: 7, kind: input, shape index: {}]
  %s8 = inlined_call_operand.vmem [shape: f32[1,64], index: 8, kind: input, shape index: {}]
  %s9 = inlined_call_operand.hbm [shape: f32[2,16,64], index: 9, kind: output, shape index: {}]
  %s10 = sld [smem:[#allocation0]]
  $region73: #{tpu_custom_call.1} parent=0
    _
  %s12 = ssub.s32 1, %s10
  %s13 = scalar_select 0, %s12, %s10
  $region1: #{tpu_custom_call.1} parent=0
    #allocation3 [shape = 'u8[16384]{0}', space=vmem, size = 0x4000, scoped, tag = 'input window, operand 0']
    #allocation4 [shape = 's32[2]{0}', space=sflag, size = 0x8, scoped, tag = 'scoped memory for tpu_custom_call.1']
    #allocation5 [shape = 's32[2]{0}', space=sflag, size = 0x8, scoped, tag = 'scoped memory for tpu_custom_call.1']
    #allocation6 [shape = 'u8[16384]{0}', space=vmem, size = 0x4000, scoped, tag = 'output window, operand 0']
    %14 = vsyncpa [#allocation4], 0
    %s15 = scalar_lea.sflag [#allocation4], 1
    %16 = vsyncpa %s15, 0
    %17 = vsyncpa [#allocation5], 0
    %s18 = scalar_lea.sflag [#allocation5], 1
    %19 = vsyncpa %s18, 0
    loop: start=0, step=1, limit=4
    $region2: #{tpu_custom_call.1} parent=1 // loop_pre_header
      _
    $region3: #{tpu_custom_call.1} parent=1 // loop_header
      %s21 = sphi 0, %s25
      %p22 = scmp.ge.s32.totalorder %s21, 4
      %s31 = sphi 0, %s33
      %s34 = sphi 0, %s31
      %s35 = sphi 0, %s34
      %s51 = sphi 0, %s35
      %s55 = sphi 0, %s55
      %s57 = sphi 0, %s55
      %s58 = sphi 0, %s57
      %s72 = sphi 0, %s58
      %s76 = sphi 0, %s76
      %s78 = sphi 0, %s76
      %s79 = sphi 0, %s78
      %s93 = sphi 0, %s79
      %s97 = sphi 0, %s97
      %s99 = sphi 0, %s97
      %s100 = sphi 0, %s99
      %s114 = sphi 0, %s100
      %s118 = sphi 0, %s118
      %s120 = sphi 0, %s118
      %s121 = sphi 0, %s120
      %s135 = sphi 0, %s121
      %s139 = sphi 0, %s139
      %s141 = sphi 0, %s139
      %s142 = sphi 0, %s141
      %s156 = sphi 0, %s142
      %s160 = sphi 0, %s160
      %s162 = sphi 0, %s160
      %s163 = sphi 0, %s162
      %s177 = sphi 0, %s163
      %s181 = sphi 0, %s181
      %s183 = sphi 0, %s181
      %s184 = sphi 0, %s183
      %s198 = sphi 0, %s184
      %s202 = sphi 0, %s202
      %s204 = sphi 0, %s202
      %s205 = sphi 0, %s204
      %s219 = sphi 0, %s205
      %s225 = sphi 0, %s227
      %s228 = sphi 0, %s225
      %s229 = sphi 0, %s228
      %s245 = sphi 0, %s229
    $region4: #{tpu_custom_call.1} parent=1 // loop_header_branch
      %24 = sbr.rel (%p22) target = $region8
    $region5: #{tpu_custom_call.1} parent=1 // loop_body
      %s26 = ssub.s32 %s21, 1
      %s27 = ssub.s32 %s21, 2
      %s28 = sadd.s32 %s21, 1
      %s29 = ssub.s32 %s21, %s28
      %p30 = scmp.eq.s32.totalorder %s29, 0
      %s32 = sadd.s32 %s31, 1
      %s33 = scalar_select %p30, %s31, %s32
      %p36 = pneg %p30
      %p37 = scmp.eq.s32.totalorder %s21, 1
      %p38 = por %p36, %p37
      %p39 = scmp.ne.s32.totalorder %s31, %s34
      %p40 = scmp.eq.s32.totalorder %s21, 0
      %p41 = por %p39, %p40
      %p42 = scmp.ne.s32.totalorder %s31, %s34
      %p43 = scmp.eq.s32.totalorder %s26, 1
      %p44 = por %p42, %p43
      %p45 = scmp.ne.s32.totalorder %s34, %s35
      %p46 = scmp.eq.s32.totalorder %s26, 0
      %p47 = por %p45, %p46
      %p48 = scmp.ne.s32.totalorder %s34, %s35
      %p49 = scmp.eq.s32.totalorder %s27, 1
      %p50 = por %p48, %p49
      %p52 = scmp.ne.s32.totalorder %s35, %s51
      %p53 = scmp.eq.s32.totalorder %s27, 0
      %p54 = por %p52, %p53
      %s56 = sadd.s32 %s55, 1
      %p59 = scmp.eq.s32.totalorder %s21, 1
      %p60 = scmp.ne.s32.totalorder %s55, %s57
      %p61 = scmp.eq.s32.totalorder %s21, 0
      %p62 = por %p60, %p61
      %p63 = scmp.ne.s32.totalorder %s55, %s57
      %p64 = scmp.eq.s32.totalorder %s26, 1
      %p65 = por %p63, %p64
      %p66 = scmp.ne.s32.totalorder %s57, %s58
      %p67 = scmp.eq.s32.totalorder %s26, 0
      %p68 = por %p66, %p67
      %p69 = scmp.ne.s32.totalorder %s57, %s58
      %p70 = scmp.eq.s32.totalorder %s27, 1
      %p71 = por %p69, %p70
      %p73 = scmp.ne.s32.totalorder %s58, %s72
      %p74 = scmp.eq.s32.totalorder %s27, 0
      %p75 = por %p73, %p74
      %s77 = sadd.s32 %s76, 1
      %p80 = scmp.eq.s32.totalorder %s21, 1
      %p81 = scmp.ne.s32.totalorder %s76, %s78
      %p82 = scmp.eq.s32.totalorder %s21, 0
      %p83 = por %p81, %p82
      %p84 = scmp.ne.s32.totalorder %s76, %s78
      %p85 = scmp.eq.s32.totalorder %s26, 1
      %p86 = por %p84, %p85
      %p87 = scmp.ne.s32.totalorder %s78, %s79
      %p88 = scmp.eq.s32.totalorder %s26, 0
      %p89 = por %p87, %p88
      %p90 = scmp.ne.s32.totalorder %s78, %s79
      %p91 = scmp.eq.s32.totalorder %s27, 1
      %p92 = por %p90, %p91
      %p94 = scmp.ne.s32.totalorder %s79, %s93
      %p95 = scmp.eq.s32.totalorder %s27, 0
      %p96 = por %p94, %p95
      %s98 = sadd.s32 %s97, 1
      %p101 = scmp.eq.s32.totalorder %s21, 1
      %p102 = scmp.ne.s32.totalorder %s97, %s99
      %p103 = scmp.eq.s32.totalorder %s21, 0
      %p104 = por %p102, %p103
      %p105 = scmp.ne.s32.totalorder %s97, %s99
      %p106 = scmp.eq.s32.totalorder %s26, 1
      %p107 = por %p105, %p106
      %p108 = scmp.ne.s32.totalorder %s99, %s100
      %p109 = scmp.eq.s32.totalorder %s26, 0
      %p110 = por %p108, %p109
      %p111 = scmp.ne.s32.totalorder %s99, %s100
      %p112 = scmp.eq.s32.totalorder %s27, 1
      %p113 = por %p111, %p112
      %p115 = scmp.ne.s32.totalorder %s100, %s114
      %p116 = scmp.eq.s32.totalorder %s27, 0
      %p117 = por %p115, %p116
      %s119 = sadd.s32 %s118, 1
      %p122 = scmp.eq.s32.totalorder %s21, 1
      %p123 = scmp.ne.s32.totalorder %s118, %s120
      %p124 = scmp.eq.s32.totalorder %s21, 0
      %p125 = por %p123, %p124
      %p126 = scmp.ne.s32.totalorder %s118, %s120
      %p127 = scmp.eq.s32.totalorder %s26, 1
      %p128 = por %p126, %p127
      %p129 = scmp.ne.s32.totalorder %s120, %s121
      %p130 = scmp.eq.s32.totalorder %s26, 0
      %p131 = por %p129, %p130
      %p132 = scmp.ne.s32.totalorder %s120, %s121
      %p133 = scmp.eq.s32.totalorder %s27, 1
      %p134 = por %p132, %p133
      %p136 = scmp.ne.s32.totalorder %s121, %s135
      %p137 = scmp.eq.s32.totalorder %s27, 0
      %p138 = por %p136, %p137
      %s140 = sadd.s32 %s139, 1
      %p143 = scmp.eq.s32.totalorder %s21, 1
      %p144 = scmp.ne.s32.totalorder %s139, %s141
      %p145 = scmp.eq.s32.totalorder %s21, 0
      %p146 = por %p144, %p145
      %p147 = scmp.ne.s32.totalorder %s139, %s141
      %p148 = scmp.eq.s32.totalorder %s26, 1
      %p149 = por %p147, %p148
      %p150 = scmp.ne.s32.totalorder %s141, %s142
      %p151 = scmp.eq.s32.totalorder %s26, 0
      %p152 = por %p150, %p151
      %p153 = scmp.ne.s32.totalorder %s141, %s142
      %p154 = scmp.eq.s32.totalorder %s27, 1
      %p155 = por %p153, %p154
      %p157 = scmp.ne.s32.totalorder %s142, %s156
      %p158 = scmp.eq.s32.totalorder %s27, 0
      %p159 = por %p157, %p158
      %s161 = sadd.s32 %s160, 1
      %p164 = scmp.eq.s32.totalorder %s21, 1
      %p165 = scmp.ne.s32.totalorder %s160, %s162
      %p166 = scmp.eq.s32.totalorder %s21, 0
      %p167 = por %p165, %p166
      %p168 = scmp.ne.s32.totalorder %s160, %s162
      %p169 = scmp.eq.s32.totalorder %s26, 1
      %p170 = por %p168, %p169
      %p171 = scmp.ne.s32.totalorder %s162, %s163
      %p172 = scmp.eq.s32.totalorder %s26, 0
      %p173 = por %p171, %p172
      %p174 = scmp.ne.s32.totalorder %s162, %s163
      %p175 = scmp.eq.s32.totalorder %s27, 1
      %p176 = por %p174, %p175
      %p178 = scmp.ne.s32.totalorder %s163, %s177
      %p179 = scmp.eq.s32.totalorder %s27, 0
      %p180 = por %p178, %p179
      %s182 = sadd.s32 %s181, 1
      %p185 = scmp.eq.s32.totalorder %s21, 1
      %p186 = scmp.ne.s32.totalorder %s181, %s183
      %p187 = scmp.eq.s32.totalorder %s21, 0
      %p188 = por %p186, %p187
      %p189 = scmp.ne.s32.totalorder %s181, %s183
      %p190 = scmp.eq.s32.totalorder %s26, 1
      %p191 = por %p189, %p190
      %p192 = scmp.ne.s32.totalorder %s183, %s184
      %p193 = scmp.eq.s32.totalorder %s26, 0
      %p194 = por %p192, %p193
      %p195 = scmp.ne.s32.totalorder %s183, %s184
      %p196 = scmp.eq.s32.totalorder %s27, 1
      %p197 = por %p195, %p196
      %p199 = scmp.ne.s32.totalorder %s184, %s198
      %p200 = scmp.eq.s32.totalorder %s27, 0
      %p201 = por %p199, %p200
      %s203 = sadd.s32 %s202, 1
      %p206 = scmp.eq.s32.totalorder %s21, 1
      %p207 = scmp.ne.s32.totalorder %s202, %s204
      %p208 = scmp.eq.s32.totalorder %s21, 0
      %p209 = por %p207, %p208
      %p210 = scmp.ne.s32.totalorder %s202, %s204
      %p211 = scmp.eq.s32.totalorder %s26, 1
      %p212 = por %p210, %p211
      %p213 = scmp.ne.s32.totalorder %s204, %s205
      %p214 = scmp.eq.s32.totalorder %s26, 0
      %p215 = por %p213, %p214
      %p216 = scmp.ne.s32.totalorder %s204, %s205
      %p217 = scmp.eq.s32.totalorder %s27, 1
      %p218 = por %p216, %p217
      %p220 = scmp.ne.s32.totalorder %s205, %s219
      %p221 = scmp.eq.s32.totalorder %s27, 0
      %p222 = por %p220, %p221
      %s223 = ssub.s32 %s21, %s28
      %p224 = scmp.eq.s32.totalorder %s223, 0
      %s226 = sadd.s32 %s225, 1
      %s227 = scalar_select %p224, %s225, %s226
      %p230 = pneg %p224
      %p231 = scmp.eq.s32.totalorder %s21, 1
      %p232 = por %p230, %p231
      %p233 = scmp.ne.s32.totalorder %s225, %s228
      %p234 = scmp.eq.s32.totalorder %s21, 0
      %p235 = por %p233, %p234
      %p236 = scmp.ne.s32.totalorder %s225, %s228
      %p237 = scmp.eq.s32.totalorder %s26, 1
      %p238 = por %p236, %p237
      %p239 = scmp.ne.s32.totalorder %s228, %s229
      %p240 = scmp.eq.s32.totalorder %s26, 0
      %p241 = por %p239, %p240
      %p242 = scmp.ne.s32.totalorder %s228, %s229
      %p243 = scmp.eq.s32.totalorder %s27, 1
      %p244 = por %p242, %p243
      %p246 = scmp.ne.s32.totalorder %s229, %s245
      %p247 = scmp.eq.s32.totalorder %s27, 0
      %p248 = por %p246, %p247
      %p249 = scmp.le.s32.totalorder 1, %s21
      %p250 = scmp.lt.s32.totalorder %s21, 3
      %p251 = pnand %p249, %p250
      %p252 = pneg %p251
      // Predicated region
      $region9: #{tpu_custom_call.1} parent=5 // pred_check
        _
      $region10: #{tpu_custom_call.1} parent=5 // pred_check_branch
        %254 = sbr.rel (%p251) target = $region12
      $region11: #{tpu_custom_call.1} parent=5 // pred_region
        %s255 = ssub.s32 %s21, 1
        // Predicated region
        $region13: #{tpu_custom_call.1} parent=11 // pred_check
          %p256 = pneg %p68
        $region14: #{tpu_custom_call.1} parent=11 // pred_check_branch
          %258 = sbr.rel (%p256) target = $region16
        $region15: #{tpu_custom_call.1} parent=11 // pred_region
          _
        $region16: #{tpu_custom_call.1} parent=11 // pred_fallthru
          _
        // Predicated region
        $region17: #{tpu_custom_call.1} parent=11 // pred_check
          %p259 = pneg %p89
        $region18: #{tpu_custom_call.1} parent=11 // pred_check_branch
          %261 = sbr.rel (%p259) target = $region20
        $region19: #{tpu_custom_call.1} parent=11 // pred_region
          _
        $region20: #{tpu_custom_call.1} parent=11 // pred_fallthru
          _
        // Predicated region
        $region21: #{tpu_custom_call.1} parent=11 // pred_check
          %p262 = pneg %p110
        $region22: #{tpu_custom_call.1} parent=11 // pred_check_branch
          %264 = sbr.rel (%p262) target = $region24
        $region23: #{tpu_custom_call.1} parent=11 // pred_region
          _
        $region24: #{tpu_custom_call.1} parent=11 // pred_fallthru
          _
        // Predicated region
        $region25: #{tpu_custom_call.1} parent=11 // pred_check
          %p265 = pneg %p131
        $region26: #{tpu_custom_call.1} parent=11 // pred_check_branch
          %267 = sbr.rel (%p265) target = $region28
        $region27: #{tpu_custom_call.1} parent=11 // pred_region
          _
        $region28: #{tpu_custom_call.1} parent=11 // pred_fallthru
          _
        // Predicated region
        $region29: #{tpu_custom_call.1} parent=11 // pred_check
          %p268 = pneg %p152
        $region30: #{tpu_custom_call.1} parent=11 // pred_check_branch
          %270 = sbr.rel (%p268) target = $region32
        $region31: #{tpu_custom_call.1} parent=11 // pred_region
          _
        $region32: #{tpu_custom_call.1} parent=11 // pred_fallthru
          _
        // Predicated region
        $region33: #{tpu_custom_call.1} parent=11 // pred_check
          %p271 = pneg %p173
        $region34: #{tpu_custom_call.1} parent=11 // pred_check_branch
          %273 = sbr.rel (%p271) target = $region36
        $region35: #{tpu_custom_call.1} parent=11 // pred_region
          _
        $region36: #{tpu_custom_call.1} parent=11 // pred_fallthru
          _
        // Predicated region
        $region37: #{tpu_custom_call.1} parent=11 // pred_check
          %p274 = pneg %p194
        $region38: #{tpu_custom_call.1} parent=11 // pred_check_branch
          %276 = sbr.rel (%p274) target = $region40
        $region39: #{tpu_custom_call.1} parent=11 // pred_region
          _
        $region40: #{tpu_custom_call.1} parent=11 // pred_fallthru
          _
        // Predicated region
        $region41: #{tpu_custom_call.1} parent=11 // pred_check
          %p277 = pneg %p215
        $region42: #{tpu_custom_call.1} parent=11 // pred_check_branch
          %279 = sbr.rel (%p277) target = $region44
        $region43: #{tpu_custom_call.1} parent=11 // pred_region
          _
        $region44: #{tpu_custom_call.1} parent=11 // pred_fallthru
          _
      $region12: #{tpu_custom_call.1} parent=5 // pred_fallthru
        _
      %p280 = scmp.lt.s32.totalorder %s21, 2
      // Predicated region
      $region45: #{tpu_custom_call.1} parent=5 // pred_check
        %p281 = pneg %p280
      $region46: #{tpu_custom_call.1} parent=5 // pred_check_branch
        %283 = sbr.rel (%p281) target = $region48
      $region47: #{tpu_custom_call.1} parent=5 // pred_region
        // Predicated region
        $region49: #{tpu_custom_call.1} parent=47 // pred_check
          %p284 = pneg %p41
        $region50: #{tpu_custom_call.1} parent=47 // pred_check_branch
          %286 = sbr.rel (%p284) target = $region52
        $region51: #{tpu_custom_call.1} parent=47 // pred_region
          %s287 = sand.u32 %s31, 1
          %s288 = scalar_lea.sflag [#allocation4], %s287
          %s289 = sand.u32 %s31, 1
          %s290 = smul.addr %s289, 16
          %s291 = scalar_lea.vmem [#allocation3], %s290
          %s293 = ssub.s32 256, 256
          %294 = vsyncadd %s288, %s293
          %s295 = smul.addr %s21, 2
          %s296 = smul.addr %s295, 128
          %s297 = scalar_lea.hbm %s0, %s296
          %s298 = sshll.u32 %s291, 4
          %s299 = int_to_ptr.vmem [resolvable:$true] %s298
          %304 = dma.hbm_to_vmem [thread:$0]  %s297, 256, %s299, %s288, 128, 128, 8
        $region52: #{tpu_custom_call.1} parent=47 // pred_fallthru
          _
      $region48: #{tpu_custom_call.1} parent=5 // pred_fallthru
        _
      %p305 = scmp.le.s32.totalorder 1, %s21
      %p306 = scmp.lt.s32.totalorder %s21, 3
      %p307 = pnand %p305, %p306
      %p308 = pneg %p307
      // Predicated region
      $region53: #{tpu_custom_call.1} parent=5 // pred_check
        _
      $region54: #{tpu_custom_call.1} parent=5 // pred_check_branch
        %310 = sbr.rel (%p307) target = $region56
      $region55: #{tpu_custom_call.1} parent=5 // pred_region
        %s311 = ssub.s32 %s21, 1
        %s312 = sand.u32 %s34, 1
        %s313 = scalar_lea.sflag [#allocation4], %s312
        %s314 = sand.u32 %s34, 1
        %s315 = smul.addr %s314, 16
        %s316 = scalar_lea.vmem [#allocation3], %s315
        // Predicated region
        $region57: #{tpu_custom_call.1} parent=55 // pred_check
          %p317 = pneg %p47
        $region58: #{tpu_custom_call.1} parent=55 // pred_check_branch
          %319 = sbr.rel (%p317) target = $region60
        $region59: #{tpu_custom_call.1} parent=55 // pred_region
          %320 = dma.done %s313, 256
        $region60: #{tpu_custom_call.1} parent=55 // pred_fallthru
          _
        %s321 = sand.u32 %s34, 1
        %s322 = scalar_lea.sflag [#allocation4], %s321
        %s323 = sand.u32 %s34, 1
        %s324 = smul.addr %s323, 16
        %s325 = scalar_lea.vmem [#allocation3], %s324
        %p326 = pneg %p47
        %p327 = pneg %p44
        %p328 = pneg %p68
        %p329 = pneg %p65
        %p330 = pneg %p89
        %p331 = pneg %p86
        %p332 = pneg %p110
        %p333 = pneg %p107
        %p334 = pneg %p131
        %p335 = pneg %p128
        %p336 = pneg %p152
        %p337 = pneg %p149
        %p338 = pneg %p173
        %p339 = pneg %p170
        %p340 = pneg %p194
        %p341 = pneg %p191
        %p342 = pneg %p215
        %p343 = pneg %p212
        %p344 = pneg %p241
        %p345 = pneg %p238
        %s346 = sand.u32 %s228, 1
        %s347 = scalar_lea.sflag [#allocation5], %s346
        %s348 = sand.u32 %s228, 1
        %s349 = smul.addr %s348, 16
        %s350 = scalar_lea.vmem [#allocation6], %s349
        %v351 = vld [vmem:[%s2] sm:$0x1]
        %v352 = vld [vmem:[%s3] sm:$0xff]
        %v353 = vld [vmem:[%s3 + $0x8] sm:$0xff]
        %v354 = vld [vmem:[%s3 + $0x10] sm:$0xff]
        %v355 = vld [vmem:[%s3 + $0x18] sm:$0xff]
        %v356 = vld [vmem:[%s3 + $0x20] sm:$0xff]
        %v357 = vld [vmem:[%s3 + $0x28] sm:$0xff]
        %v358 = vld [vmem:[%s3 + $0x30] sm:$0xff]
        %v359 = vld [vmem:[%s3 + $0x38] sm:$0xff]
        %v360 = vld [vmem:[%s4] sm:$0x1]
        %v361 = vld [vmem:[%s5] sm:$0xf]
        %v362 = vld [vmem:[%s6] sm:$0x1]
        %v363 = vld [vmem:[%s7] sm:$0xff]
        %v364 = vld [vmem:[%s7 + $0x8] sm:$0xff]
        %v365 = vld [vmem:[%s7 + $0x10] sm:$0xff]
        %v366 = vld [vmem:[%s7 + $0x18] sm:$0xff]
        %v367 = vld [vmem:[%s7 + $0x20] sm:$0xff]
        %v368 = vld [vmem:[%s7 + $0x28] sm:$0xff]
        %v369 = vld [vmem:[%s7 + $0x30] sm:$0xff]
        %v370 = vld [vmem:[%s7 + $0x38] sm:$0xff]
        %v371 = vld [vmem:[%s8] sm:$0x1]
        %v372 = vld [vmem:[%s316] sm:$0xff]
        %v373 = vld [vmem:[%s316 + $0x8] sm:$0xff]
        %vm374 = vcmask 581632
        %375 = vst.msk [vmem:[#allocation2] sm:$0x1] %vm374, 0.0
        %376 = vst.msk [vmem:[#allocation2 + $0x11] sm:$0x1] %vm374, 0.0
        %vm377 = vcmask 31744
        %378 = vst.msk [vmem:[#allocation2 + $0x1] sm:$0xff] %vm377, 0.0
        %379 = vst.msk [vmem:[#allocation2 + $0x9] sm:$0xff] %vm377, 0.0
        %vm380 = vcmask 589344
        %381 = vst.msk [vmem:[#allocation2 + $0x1] sm:$0xff] %vm380, 0.0
        %382 = vst.msk [vmem:[#allocation2 + $0x9] sm:$0xff] %vm380, 0.0
        %385 = vrot.lane.b32.xlu0 %v372, 4
        %v386 = vpop.permute.xlu0 %385
        %387 = vrot.lane.b32.xlu0 %v373, 4
        %v388 = vpop.permute.xlu0 %387
        %vm391 = vcmask 556064
        %392 = vst.msk [vmem:[#allocation2 + $0x1] sm:$0xff] %vm391, %v386
        %393 = vst.msk [vmem:[#allocation2 + $0x9] sm:$0xff] %vm391, %v388
        %v394 = vld [vmem:[#allocation2] sm:$0xff]
        %v395 = vld [vmem:[#allocation2 + $0x8] sm:$0xff]
        %v396 = vld [vmem:[%s1] sm:$0x1]
        %v397 = vlaneseq
        %v398 = vshrl.u32 %v397, 7
        %v399 = vsub.s32 0, %v398
        %v400 = vrot.slane %v396, %v399
        %v401 = vmul.f32 %v394, %v400
        %v402 = vmul.f32 %v395, %v400
        %v403 = vld [vmem:[%s1 + $0x1] sm:$0x1]
        %v404 = vlaneseq
        %v405 = vshrl.u32 %v404, 7
        %v406 = vsub.s32 0, %v405
        %v407 = vrot.slane %v403, %v406
        %409 = vrot.lane.b32.xlu0 %v407, 4
        %v410 = vpop.permute.xlu0 %409
        %v412 = vmul.f32 %v394, %v410
        %v413 = vmul.f32 %v395, %v410
        %416 = vrot.lane.b32.xlu0 %v412, 124
        %v417 = vpop.permute.xlu0 %416
        %418 = vrot.lane.b32.xlu0 %v413, 124
        %v419 = vpop.permute.xlu0 %418
        %v422 = vadd.f32 %v401, %v417
        %v423 = vadd.f32 %v402, %v419
        %v424 = vld [vmem:[%s1 + $0x2] sm:$0x1]
        %v425 = vlaneseq
        %v426 = vshrl.u32 %v425, 7
        %v427 = vsub.s32 0, %v426
        %v428 = vrot.slane %v424, %v427
        %430 = vrot.lane.b32.xlu0 %v428, 8
        %v431 = vpop.permute.xlu0 %430
        %v433 = vmul.f32 %v394, %v431
        %v434 = vmul.f32 %v395, %v431
        %437 = vrot.lane.b32.xlu0 %v433, 120
        %v438 = vpop.permute.xlu0 %437
        %439 = vrot.lane.b32.xlu0 %v434, 120
        %v440 = vpop.permute.xlu0 %439
        %v443 = vadd.f32 %v422, %v438
        %v444 = vadd.f32 %v423, %v440
        %v445 = vld [vmem:[#allocation2 + $0x1] sm:$0xff]
        %v446 = vld [vmem:[#allocation2 + $0x9] sm:$0xff]
        %v447 = vld [vmem:[%s1 + $0x3] sm:$0x1]
        %v448 = vlaneseq
        %v449 = vshrl.u32 %v448, 7
        %v450 = vsub.s32 0, %v449
        %v451 = vrot.slane %v447, %v450
        %v452 = vmul.f32 %v445, %v451
        %v453 = vmul.f32 %v446, %v451
        %v454 = vadd.f32 %v443, %v452
        %v455 = vadd.f32 %v444, %v453
        %v456 = vld [vmem:[%s1 + $0x4] sm:$0x1]
        %v457 = vlaneseq
        %v458 = vshrl.u32 %v457, 7
        %v459 = vsub.s32 0, %v458
        %v460 = vrot.slane %v456, %v459
        %462 = vrot.lane.b32.xlu0 %v460, 4
        %v463 = vpop.permute.xlu0 %462
        %v465 = vmul.f32 %v445, %v463
        %v466 = vmul.f32 %v446, %v463
        %469 = vrot.lane.b32.xlu0 %v465, 124
        %v470 = vpop.permute.xlu0 %469
        %471 = vrot.lane.b32.xlu0 %v466, 124
        %v472 = vpop.permute.xlu0 %471
        %v475 = vadd.f32 %v454, %v470
        %v476 = vadd.f32 %v455, %v472
        %v477 = vld [vmem:[%s1 + $0x5] sm:$0x1]
        %v478 = vlaneseq
        %v479 = vshrl.u32 %v478, 7
        %v480 = vsub.s32 0, %v479
        %v481 = vrot.slane %v477, %v480
        %483 = vrot.lane.b32.xlu0 %v481, 8
        %v484 = vpop.permute.xlu0 %483
        %v486 = vmul.f32 %v445, %v484
        %v487 = vmul.f32 %v446, %v484
        %490 = vrot.lane.b32.xlu0 %v486, 120
        %v491 = vpop.permute.xlu0 %490
        %492 = vrot.lane.b32.xlu0 %v487, 120
        %v493 = vpop.permute.xlu0 %492
        %v496 = vadd.f32 %v475, %v491
        %v497 = vadd.f32 %v476, %v493
        %v498 = vld [vmem:[#allocation2 + $0x2] sm:$0xff]
        %v499 = vld [vmem:[#allocation2 + $0xa] sm:$0xff]
        %v500 = vld [vmem:[%s1 + $0x6] sm:$0x1]
        %v501 = vlaneseq
        %v502 = vshrl.u32 %v501, 7
        %v503 = vsub.s32 0, %v502
        %v504 = vrot.slane %v500, %v503
        %v505 = vmul.f32 %v498, %v504
        %v506 = vmul.f32 %v499, %v504
        %v507 = vadd.f32 %v496, %v505
        %v508 = vadd.f32 %v497, %v506
        %v509 = vld [vmem:[%s1 + $0x7] sm:$0x1]
        %v510 = vlaneseq
        %v511 = vshrl.u32 %v510, 7
        %v512 = vsub.s32 0, %v511
        %v513 = vrot.slane %v509, %v512
        %515 = vrot.lane.b32.xlu0 %v513, 4
        %v516 = vpop.permute.xlu0 %515
        %v518 = vmul.f32 %v498, %v516
        %v519 = vmul.f32 %v499, %v516
        %522 = vrot.lane.b32.xlu0 %v518, 124
        %v523 = vpop.permute.xlu0 %522
        %524 = vrot.lane.b32.xlu0 %v519, 124
        %v525 = vpop.permute.xlu0 %524
        %v528 = vadd.f32 %v507, %v523
        %v529 = vadd.f32 %v508, %v525
        %v530 = vld [vmem:[%s1 + $0x8] sm:$0x1]
        %v531 = vlaneseq
        %v532 = vshrl.u32 %v531, 7
        %v533 = vsub.s32 0, %v532
        %v534 = vrot.slane %v530, %v533
        %536 = vrot.lane.b32.xlu0 %v534, 8
        %v537 = vpop.permute.xlu0 %536
        %v539 = vmul.f32 %v498, %v537
        %v540 = vmul.f32 %v499, %v537
        %543 = vrot.lane.b32.xlu0 %v539, 120
        %v544 = vpop.permute.xlu0 %543
        %545 = vrot.lane.b32.xlu0 %v540, 120
        %v546 = vpop.permute.xlu0 %545
        %v549 = vadd.f32 %v528, %v544
        %v550 = vadd.f32 %v529, %v546
        %v552 = vlaneseq
        %v553 = vshrl.u32 %v552, 7
        %v554 = vsub.s32 0, %v553
        %v555 = vrot.slane %v351, %v554
        %v557 = vadd.f32 %v549, %v555
        %v558 = vadd.f32 %v550, %v555
        %v559 = vmax.f32 %v557, 0.0
        %v560 = vmax.f32 %v558, 0.0
        %vm561 = vcmask 523264
        %v562 = vsel %vm561, %v559, 0.0
        %v563 = vsel %vm561, %v560, 0.0
        %v564 = vadd.f32 %v562, %v563
        %v565 = vrot.slane %v564, 4
        %v566 = vadd.f32 %v564, %v565
        %v567 = vrot.slane %v566, 2
        %v568 = vadd.f32 %v566, %v567
        %v569 = vrot.slane %v568, 1
        %v570 = vadd.f32 %v568, %v569
        %v572 = vsel %vm561, %v570, 0
        %574 = vmatprep.subr.mxu0 0.0
        %575 = vmatpush1.msra.mxu0 %v352
        %576 = vmatprep.subr.mxu0 0.0
        %577 = vmatpush1.msra.mxu0 %v353
        %578 = vmatprep.subr.mxu0 0.0
        %579 = vmatpush1.msra.mxu0 %v354
        %580 = vmatprep.subr.mxu0 0.0
        %581 = vmatpush1.msra.mxu0 %v355
        %582 = vmatprep.subr.mxu0 0.0
        %583 = vmatpush1.msra.mxu0 %v356
        %584 = vmatprep.subr.mxu0 0.0
        %585 = vmatpush1.msra.mxu0 %v357
        %586 = vmatprep.subr.mxu0 0.0
        %587 = vmatpush1.msra.mxu0 %v358
        %588 = vmatprep.subr.mxu0 0.0
        %589 = vmatpush1.msra.mxu0 %v359
        %590 = vmatprep.subr.mxu0 0.0
        %591 = vmatpush1.msra.mxu0 0.0
        %592 = vmatprep.subr.mxu0 0.0
        %593 = vmatpush1.msra.mxu0 0.0
        %594 = vmatprep.subr.mxu0 0.0
        %595 = vmatpush1.msra.mxu0 0.0
        %596 = vmatprep.subr.mxu0 0.0
        %597 = vmatpush1.msra.mxu0 0.0
        %598 = vmatprep.subr.mxu0 0.0
        %599 = vmatpush1.msra.mxu0 0.0
        %600 = vmatprep.subr.mxu0 0.0
        %601 = vmatpush1.msra.mxu0 0.0
        %602 = vmatprep.subr.mxu0 0.0
        %603 = vmatpush1.msra.mxu0 0.0
        %604 = vmatprep.subr.mxu0 0.0
        %605 = vmatpush1.msra.mxu0 0.0
        %606 = vmatprep.subr.mxu0 0.0
        %607 = vmatpush1.msra.mxu0 0.0
        %608 = vmatprep.subr.mxu0 0.0
        %609 = vmatpush1.msra.mxu0 0.0
        %610 = vmatprep.subr.mxu0 0.0
        %611 = vmatpush1.msra.mxu0 0.0
        %612 = vmatprep.subr.mxu0 0.0
        %613 = vmatpush1.msra.mxu0 0.0
        %614 = vmatprep.subr.mxu0 0.0
        %615 = vmatpush1.msra.mxu0 0.0
        %616 = vmatprep.subr.mxu0 0.0
        %617 = vmatpush1.msra.mxu0 0.0
        %618 = vmatprep.subr.mxu0 0.0
        %619 = vmatpush1.msra.mxu0 0.0
        %620 = vmatprep.subr.mxu0 0.0
        %621 = vmatpush1.msra.mxu0 0.0
        %622 = vmatprep.subr.mxu0 0.0
        %623 = vmatpush1.msra.mxu0 0.0
        %624 = vmatprep.subr.mxu0 0.0
        %625 = vmatpush1.msra.mxu0 0.0
        %626 = vmatprep.subr.mxu0 0.0
        %627 = vmatpush1.msra.mxu0 0.0
        %628 = vmatprep.subr.mxu0 0.0
        %629 = vmatpush1.msra.mxu0 0.0
        %630 = vmatprep.subr.mxu0 0.0
        %631 = vmatpush1.msra.mxu0 0.0
        %632 = vmatprep.subr.mxu0 0.0
        %633 = vmatpush1.msra.mxu0 0.0
        %634 = vmatprep.subr.mxu0 0.0
        %635 = vmatpush1.msra.mxu0 0.0
        %636 = vmatprep.subr.mxu0 0.0
        %637 = vmatpush1.msra.mxu0 0.0
        %638 = vmatprep.mubr.f32.mxu0 0.0
        %639 = vmatmul.mubr.f32.gmra.mrb[0].mxu0 %v572
        %v640 = vpop.f32.mrb[0].mxu0
        %v641 = vadd.f32 %v360, %v640
        %v642 = vpop.f32.mrb[0].mxu0
        %643 = vdwg.mxu0
        %v644 = vmax.f32 %v641, 0.0
        %v646 = vsel %vm377, %v644, 0
        %vm648 = vcmask 1043456
        %v650 = vsel %vm648, %v361, 0
        %652 = vmatprep.subr.mxu0 0.0
        %653 = vmatpush1.msra.mxu0 %v650
        %654 = vmatprep.subr.mxu0 0.0
        %655 = vmatpush1.msra.mxu0 0.0
        %656 = vmatprep.subr.mxu0 0.0
        %657 = vmatpush1.msra.mxu0 0.0
        %658 = vmatprep.subr.mxu0 0.0
        %659 = vmatpush1.msra.mxu0 0.0
        %660 = vmatprep.subr.mxu0 0.0
        %661 = vmatpush1.msra.mxu0 0.0
        %662 = vmatprep.subr.mxu0 0.0
        %663 = vmatpush1.msra.mxu0 0.0
        %664 = vmatprep.subr.mxu0 0.0
        %665 = vmatpush1.msra.mxu0 0.0
        %666 = vmatprep.subr.mxu0 0.0
        %667 = vmatpush1.msra.mxu0 0.0
        %668 = vmatprep.subr.mxu0 0.0
        %669 = vmatpush1.msra.mxu0 0.0
        %670 = vmatprep.subr.mxu0 0.0
        %671 = vmatpush1.msra.mxu0 0.0
        %672 = vmatprep.subr.mxu0 0.0
        %673 = vmatpush1.msra.mxu0 0.0
        %674 = vmatprep.subr.mxu0 0.0
        %675 = vmatpush1.msra.mxu0 0.0
        %676 = vmatprep.subr.mxu0 0.0
        %677 = vmatpush1.msra.mxu0 0.0
        %678 = vmatprep.subr.mxu0 0.0
        %679 = vmatpush1.msra.mxu0 0.0
        %680 = vmatprep.subr.mxu0 0.0
        %681 = vmatpush1.msra.mxu0 0.0
        %682 = vmatprep.subr.mxu0 0.0
        %683 = vmatpush1.msra.mxu0 0.0
        %684 = vmatprep.subr.mxu0 0.0
        %685 = vmatpush1.msra.mxu0 0.0
        %686 = vmatprep.subr.mxu0 0.0
        %687 = vmatpush1.msra.mxu0 0.0
        %688 = vmatprep.subr.mxu0 0.0
        %689 = vmatpush1.msra.mxu0 0.0
        %690 = vmatprep.subr.mxu0 0.0
        %691 = vmatpush1.msra.mxu0 0.0
        %692 = vmatprep.subr.mxu0 0.0
        %693 = vmatpush1.msra.mxu0 0.0
        %694 = vmatprep.subr.mxu0 0.0
        %695 = vmatpush1.msra.mxu0 0.0
        %696 = vmatprep.subr.mxu0 0.0
        %697 = vmatpush1.msra.mxu0 0.0
        %698 = vmatprep.subr.mxu0 0.0
        %699 = vmatpush1.msra.mxu0 0.0
        %700 = vmatprep.subr.mxu0 0.0
        %701 = vmatpush1.msra.mxu0 0.0
        %702 = vmatprep.subr.mxu0 0.0
        %703 = vmatpush1.msra.mxu0 0.0
        %704 = vmatprep.subr.mxu0 0.0
        %705 = vmatpush1.msra.mxu0 0.0
        %706 = vmatprep.subr.mxu0 0.0
        %707 = vmatpush1.msra.mxu0 0.0
        %708 = vmatprep.subr.mxu0 0.0
        %709 = vmatpush1.msra.mxu0 0.0
        %710 = vmatprep.subr.mxu0 0.0
        %711 = vmatpush1.msra.mxu0 0.0
        %712 = vmatprep.subr.mxu0 0.0
        %713 = vmatpush1.msra.mxu0 0.0
        %714 = vmatprep.subr.mxu0 0.0
        %715 = vmatpush1.msra.mxu0 0.0
        %716 = vmatprep.mubr.f32.mxu0 0.0
        %717 = vmatmul.mubr.f32.gmra.mrb[0].mxu0 %v646
        %v718 = vpop.f32.mrb[0].mxu0
        %v719 = vadd.f32 %v362, %v718
        %v720 = vpop.f32.mrb[0].mxu0
        %721 = vdwg.mxu0
        %v722 = vxor.u32 %v719, 2147483648
        %v723 = vmul.f32 %v722, 1.442695
        %v724 = vpow.pop %v723
        %v725 = vadd.f32 %v724, 1.0
        %v726 = vrcp.pop %v725
        %v727 = vmul.f32 1.0, %v726
        %v728 = vlaneseq
        %v729 = vshrl.u32 %v728, 7
        %v730 = vsub.s32 0, %v729
        %v731 = vrot.slane %v727, %v730
        %v732 = vmul.f32 %v559, %v731
        %v733 = vmul.f32 %v560, %v731
        %v735 = vlaneseq
        %v736 = vshrl.u32 %v735, 7
        %v737 = vsub.s32 0, %v736
        %v738 = vrot.slane %v371, %v737
        %v741 = vsel %vm561, %v732, 0
        %v744 = vsel %vm561, %v733, 0
        %746 = vmatprep.subr.mxu0 0.0
        %747 = vmatpush1.msra.mxu0 %v363
        %748 = vmatprep.subr.mxu0 0.0
        %749 = vmatpush1.msra.mxu0 %v364
        %750 = vmatprep.subr.mxu0 0.0
        %751 = vmatpush1.msra.mxu0 %v365
        %752 = vmatprep.subr.mxu0 0.0
        %753 = vmatpush1.msra.mxu0 %v366
        %754 = vmatprep.subr.mxu0 0.0
        %755 = vmatpush1.msra.mxu0 %v367
        %756 = vmatprep.subr.mxu0 0.0
        %757 = vmatpush1.msra.mxu0 %v368
        %758 = vmatprep.subr.mxu0 0.0
        %759 = vmatpush1.msra.mxu0 %v369
        %760 = vmatprep.subr.mxu0 0.0
        %761 = vmatpush1.msra.mxu0 %v370
        %762 = vmatprep.subr.mxu0 0.0
        %763 = vmatpush1.msra.mxu0 0.0
        %764 = vmatprep.subr.mxu0 0.0
        %765 = vmatpush1.msra.mxu0 0.0
        %766 = vmatprep.subr.mxu0 0.0
        %767 = vmatpush1.msra.mxu0 0.0
        %768 = vmatprep.subr.mxu0 0.0
        %769 = vmatpush1.msra.mxu0 0.0
        %770 = vmatprep.subr.mxu0 0.0
        %771 = vmatpush1.msra.mxu0 0.0
        %772 = vmatprep.subr.mxu0 0.0
        %773 = vmatpush1.msra.mxu0 0.0
        %774 = vmatprep.subr.mxu0 0.0
        %775 = vmatpush1.msra.mxu0 0.0
        %776 = vmatprep.subr.mxu0 0.0
        %777 = vmatpush1.msra.mxu0 0.0
        %778 = vmatprep.subr.mxu0 0.0
        %779 = vmatpush1.msra.mxu0 0.0
        %780 = vmatprep.subr.mxu0 0.0
        %781 = vmatpush1.msra.mxu0 0.0
        %782 = vmatprep.subr.mxu0 0.0
        %783 = vmatpush1.msra.mxu0 0.0
        %784 = vmatprep.subr.mxu0 0.0
        %785 = vmatpush1.msra.mxu0 0.0
        %786 = vmatprep.subr.mxu0 0.0
        %787 = vmatpush1.msra.mxu0 0.0
        %788 = vmatprep.subr.mxu0 0.0
        %789 = vmatpush1.msra.mxu0 0.0
        %790 = vmatprep.subr.mxu0 0.0
        %791 = vmatpush1.msra.mxu0 0.0
        %792 = vmatprep.subr.mxu0 0.0
        %793 = vmatpush1.msra.mxu0 0.0
        %794 = vmatprep.subr.mxu0 0.0
        %795 = vmatpush1.msra.mxu0 0.0
        %796 = vmatprep.subr.mxu0 0.0
        %797 = vmatpush1.msra.mxu0 0.0
        %798 = vmatprep.subr.mxu0 0.0
        %799 = vmatpush1.msra.mxu0 0.0
        %800 = vmatprep.subr.mxu0 0.0
        %801 = vmatpush1.msra.mxu0 0.0
        %802 = vmatprep.subr.mxu0 0.0
        %803 = vmatpush1.msra.mxu0 0.0
        %804 = vmatprep.subr.mxu0 0.0
        %805 = vmatpush1.msra.mxu0 0.0
        %806 = vmatprep.subr.mxu0 0.0
        %807 = vmatpush1.msra.mxu0 0.0
        %808 = vmatprep.subr.mxu0 0.0
        %809 = vmatpush1.msra.mxu0 0.0
        %810 = vmatprep.mubr.f32.mxu0 0.0
        %811 = vmatmul.mubr.f32.gmra.mrb[0].mxu0 %v741
        %v812 = vpop.f32.mrb[0].mxu0
        %v813 = vadd.f32 %v738, %v812
        %v814 = vpop.f32.mrb[0].mxu0
        %815 = vmatprep.mubr.f32.mxu0 0.0
        %816 = vmatmul.mubr.f32.gmra.mrb[0].mxu0 %v744
        %v817 = vpop.f32.mrb[0].mxu0
        %v818 = vadd.f32 %v738, %v817
        %v819 = vpop.f32.mrb[0].mxu0
        %820 = vdwg.mxu0
        %v821 = vmax.f32 %v813, 0.0
        %v822 = vmax.f32 %v818, 0.0
        %v823 = vadd.f32 %v821, %v372
        %v824 = vadd.f32 %v822, %v373
        %825 = vst.msk [vmem:[%s350] sm:$0xff] %vm561, %v823
        %826 = vst.msk [vmem:[%s350 + $0x8] sm:$0xff] %vm561, %v824
        %s827 = sand.u32 %s228, 1
        %s828 = scalar_lea.sflag [#allocation5], %s827
        %s829 = sand.u32 %s228, 1
        %s830 = smul.addr %s829, 16
        %s831 = scalar_lea.vmem [#allocation6], %s830
        // Predicated region
        $region61: #{tpu_custom_call.1} parent=55 // pred_check
          %p832 = pneg %p238
        $region62: #{tpu_custom_call.1} parent=55 // pred_check_branch
          %834 = sbr.rel (%p832) target = $region64
        $region63: #{tpu_custom_call.1} parent=55 // pred_region
          %s836 = ssub.s32 256, 256
          %837 = vsyncadd %s828, %s836
          %s838 = smul.addr %s26, 2
          %s839 = smul.addr %s838, 128
          %s840 = scalar_lea.hbm %s9, %s839
          %s841 = sshll.u32 %s831, 4
          %s842 = int_to_ptr.vmem [resolvable:$true] %s841
          %847 = dma.vmem_to_hbm [thread:$0]  %s842, 256, %s840, %s828, 128, 128, 8
        $region64: #{tpu_custom_call.1} parent=55 // pred_fallthru
          _
      $region56: #{tpu_custom_call.1} parent=5 // pred_fallthru
        _
      %p848 = scmp.le.s32.totalorder 2, %s21
      // Predicated region
      $region65: #{tpu_custom_call.1} parent=5 // pred_check
        %p849 = pneg %p848
      $region66: #{tpu_custom_call.1} parent=5 // pred_check_branch
        %851 = sbr.rel (%p849) target = $region68
      $region67: #{tpu_custom_call.1} parent=5 // pred_region
        %s852 = ssub.s32 %s21, 2
        // Predicated region
        $region69: #{tpu_custom_call.1} parent=67 // pred_check
          %p853 = pneg %p244
        $region70: #{tpu_custom_call.1} parent=67 // pred_check_branch
          %855 = sbr.rel (%p853) target = $region72
        $region71: #{tpu_custom_call.1} parent=67 // pred_region
          %s856 = sand.u32 %s229, 1
          %s857 = scalar_lea.sflag [#allocation5], %s856
          %s858 = sand.u32 %s229, 1
          %s859 = smul.addr %s858, 16
          %s860 = scalar_lea.vmem [#allocation6], %s859
          %861 = dma.done %s857, 256
        $region72: #{tpu_custom_call.1} parent=67 // pred_fallthru
          _
      $region68: #{tpu_custom_call.1} parent=5 // pred_fallthru
        _
    $region6: #{tpu_custom_call.1} parent=1 // loop_footer
      %s25 = sadd.s32 1, %s21
    $region7: #{tpu_custom_call.1} parent=1 // loop_footer_branch
      %20 = sbr.rel target = $region3
    $region8: #{tpu_custom_call.1} parent=1 // loop_exit
      _
    %862 = vsyncpa [#allocation4], 1
    %s863 = scalar_lea.sflag [#allocation4], 1
    %864 = vsyncpa %s863, 1
    %865 = vsyncpa [#allocation5], 1
    %s866 = scalar_lea.sflag [#allocation5], 1
    %867 = vsyncpa %s866, 1

</llo_original>
